<compile_context>
chip_gen: v7x
topology: tpu7x:2x2x1
jax: 0.10.0
libtpu: 0.0.40
codegen_flags: <defaults>
</compile_context>

<pallas_src>
import jax
import jax.numpy as jnp
from jax.experimental import pallas as pl
from jax.experimental.pallas import tpu as pltpu

LANE = 128
OUT_PAD = 8  # padded output width (>= 2), full last-dim of the output array


def mlp_kernel(x_ref, w1_ref, b1_ref, w2_ref, b2_ref,
               w3_ref, b3_ref, w4_ref, b4_ref, o_ref):
    # Cast x to bf16 in-kernel (hides under the input DMA); f32 accumulate.
    x = x_ref[...].astype(jnp.bfloat16)
    # Layer 1: Linear(256 -> 128) + ReLU   (Dropout(0.3) == identity at eval)
    h = jnp.dot(x, w1_ref[...],
                preferred_element_type=jnp.float32) + b1_ref[...]
    h = jnp.maximum(h, 0.0).astype(jnp.bfloat16)
    # Layer 2: Linear(128 -> 64, lane-padded to 128) + ReLU (Dropout(0.2) identity)
    h = jnp.dot(h, w2_ref[...],
                preferred_element_type=jnp.float32) + b2_ref[...]
    h = jnp.maximum(h, 0.0).astype(jnp.bfloat16)
    # Layer 3: Linear(64 -> 32, lane-padded to 128) + ReLU
    h = jnp.dot(h, w3_ref[...],
                preferred_element_type=jnp.float32) + b3_ref[...]
    h = jnp.maximum(h, 0.0).astype(jnp.bfloat16)
    # Layer 4: Linear(32 -> 2, padded to 8 output lanes); narrow f32 store
    o_ref[...] = (jnp.dot(h, w4_ref[...],
                          preferred_element_type=jnp.float32)
                  + b4_ref[...]).astype(o_ref.dtype)


def _round_up(n, m):
    return ((n + m - 1) // m) * m


def _pad2(a, rows, cols):
    r, c = a.shape
    return jnp.pad(a, ((0, rows - r), (0, cols - c)))


def _choose_tm(B, tm_max=1024):
    """Batch tile: single tile for small B; otherwise aim for >= ~8 grid steps
    (>= 4 per v7x TensorCore) so the pipeline can overlap DMA and compute."""
    Bp8 = _round_up(B, 8)          # f32 x block -> sublane multiple of 8
    if Bp8 <= 512:
        return Bp8
    target = _round_up((Bp8 + 7) // 8, 256)
    return max(256, min(tm_max, target))


def galaxy_classifier_forward(x, params, *, tm_max=1024):
    """x: [B, 256] float32. params: dict of f32 weights/biases. Returns [B, 2] f32."""
    B, in_size = x.shape
    num_out = params["w4"].shape[1]  # 2

    # --- prepare weights: bf16 operands for the MXU, zero-pad narrow layers ---
    w1 = params["w1"].astype(jnp.bfloat16)                         # [256,128]
    b1 = params["b1"].astype(jnp.float32)                          # [1,128]
    w2 = _pad2(params["w2"], LANE, LANE).astype(jnp.bfloat16)      # [128,128]
    b2 = _pad2(params["b2"].astype(jnp.float32), 1, LANE)          # [1,128]
    w3 = _pad2(params["w3"], LANE, LANE).astype(jnp.bfloat16)      # [128,128]
    b3 = _pad2(params["b3"].astype(jnp.float32), 1, LANE)          # [1,128]
    w4 = _pad2(params["w4"], LANE, OUT_PAD).astype(jnp.bfloat16)   # [128,8]
    b4 = _pad2(params["b4"].astype(jnp.float32), 1, OUT_PAD)       # [1,8]

    # --- batch tiling (x stays f32; kernel casts to bf16) ---
    tm_eff = _choose_tm(B, tm_max)
    Bp = _round_up(B, tm_eff)
    xp = x if Bp == B else jnp.pad(x, ((0, Bp - B), (0, 0)))

    flops = 2 * Bp * (in_size * 128 + 128 * 128 + 128 * 128 + 128 * OUT_PAD)
    bytes_accessed = (Bp * in_size * 4 + Bp * OUT_PAD * 4
                      + (w1.size + w2.size + w3.size + w4.size) * 2
                      + (b1.size + b2.size + b3.size + b4.size) * 4)

    full = lambda a: pl.BlockSpec(a.shape, lambda i: (0, 0))

    out_padded = pl.pallas_call(
        mlp_kernel,
        out_shape=jax.ShapeDtypeStruct((Bp, OUT_PAD), jnp.float32),
        grid_spec=pltpu.PrefetchScalarGridSpec(
            num_scalar_prefetch=0,
            grid=(Bp // tm_eff,),
            in_specs=[
                pl.BlockSpec((tm_eff, in_size), lambda i: (i, 0)),
                full(w1), full(b1),
                full(w2), full(b2),
                full(w3), full(b3),
                full(w4), full(b4),
            ],
            out_specs=pl.BlockSpec((tm_eff, OUT_PAD), lambda i: (i, 0)),
        ),
        compiler_params=pltpu.CompilerParams(
            dimension_semantics=("parallel",)),
        cost_estimate=pl.CostEstimate(flops=int(flops), transcendentals=0,
                                      bytes_accessed=int(bytes_accessed)),
    )(xp, w1, b1, w2, b2, w3, b3, w4, b4)

    return out_padded[:B, :num_out]


def init_params(key, input_size=256):
    """Deterministic init mirroring PyTorch nn.Linear default:
    U(-1/sqrt(fan_in), 1/sqrt(fan_in)) for both weight and bias."""
    sizes = [(input_size, 128), (128, 64), (64, 32), (32, 2)]
    params = {}
    keys = jax.random.split(key, 2 * len(sizes))
    for li, (fan_in, fan_out) in enumerate(sizes):
        bound = 1.0 / jnp.sqrt(jnp.float32(fan_in))
        w = jax.random.uniform(keys[2 * li], (fan_in, fan_out),
                               dtype=jnp.float32, minval=-bound, maxval=bound)
        b = jax.random.uniform(keys[2 * li + 1], (1, fan_out),
                               dtype=jnp.float32, minval=-bound, maxval=bound)
        params[f"w{li + 1}"] = w
        params[f"b{li + 1}"] = b
    return params


def reference_forward(x, params):
    """Pure-JAX reference with the same bf16-operand / f32-accumulate numerics."""
    bf = jnp.bfloat16
    h = jnp.dot(x.astype(bf), params["w1"].astype(bf),
                preferred_element_type=jnp.float32) + params["b1"]
    h = jnp.maximum(h, 0.0)
    h = jnp.dot(h.astype(bf), params["w2"].astype(bf),
                preferred_element_type=jnp.float32) + params["b2"]
    h = jnp.maximum(h, 0.0)
    h = jnp.dot(h.astype(bf), params["w3"].astype(bf),
                preferred_element_type=jnp.float32) + params["b3"]
    h = jnp.maximum(h, 0.0)
    return jnp.dot(h.astype(bf), params["w4"].astype(bf),
                   preferred_element_type=jnp.float32) + params["b4"]


if __name__ == "__main__":
    key = jax.random.PRNGKey(0)
    k_params, k_x = jax.random.split(key)

    input_size = 256
    batch = 16  # small smoke-test shape; single batch tile
    params = init_params(k_params, input_size)
    x = jax.random.normal(k_x, (batch, input_size), dtype=jnp.float32)

    out = galaxy_classifier_forward(x, params)
    out = jax.block_until_ready(out)

    ref = reference_forward(x, params)
    assert out.shape == (batch, 2), out.shape
    assert jnp.allclose(out, ref, atol=1e-2, rtol=1e-2), "mismatch vs reference"

    print("KERNEL_OK")
</pallas_src>

<mosaic_0001>
module attributes {stable_mosaic.version = 11 : i64} {
  func.func @mlp_kernel(%arg0: i32, %arg1: memref<16x256xf32, #tpu.memory_space<vmem>>, %arg2: memref<256x128xbf16, #tpu.memory_space<vmem>>, %arg3: memref<1x128xf32, #tpu.memory_space<vmem>>, %arg4: memref<128x128xbf16, #tpu.memory_space<vmem>>, %arg5: memref<1x128xf32, #tpu.memory_space<vmem>>, %arg6: memref<128x128xbf16, #tpu.memory_space<vmem>>, %arg7: memref<1x128xf32, #tpu.memory_space<vmem>>, %arg8: memref<128x8xbf16, #tpu.memory_space<vmem>>, %arg9: memref<1x8xf32, #tpu.memory_space<vmem>>, %arg10: memref<16x8xf32, #tpu.memory_space<vmem>>) attributes {dimension_semantics = [#tpu.dimension_semantics<parallel>], iteration_bounds = array<i64: 1>, scalar_prefetch = 0 : i64, scratch_operands = 0 : i64, tpu.core_type = #tpu.core_type<tc>, window_params = [{transform_indices = @transform_0, window_bounds = array<i64: 16, 256>}, {pipeline_mode = #tpu.pipeline_mode<synchronous>, transform_indices = @transform_1, window_bounds = array<i64: 256, 128>}, {pipeline_mode = #tpu.pipeline_mode<synchronous>, transform_indices = @transform_2, window_bounds = array<i64: 1, 128>}, {pipeline_mode = #tpu.pipeline_mode<synchronous>, transform_indices = @transform_3, window_bounds = array<i64: 128, 128>}, {pipeline_mode = #tpu.pipeline_mode<synchronous>, transform_indices = @transform_4, window_bounds = array<i64: 1, 128>}, {pipeline_mode = #tpu.pipeline_mode<synchronous>, transform_indices = @transform_5, window_bounds = array<i64: 128, 128>}, {pipeline_mode = #tpu.pipeline_mode<synchronous>, transform_indices = @transform_6, window_bounds = array<i64: 1, 128>}, {pipeline_mode = #tpu.pipeline_mode<synchronous>, transform_indices = @transform_7, window_bounds = array<i64: 128, 8>}, {pipeline_mode = #tpu.pipeline_mode<synchronous>, transform_indices = @transform_8, window_bounds = array<i64: 1, 8>}, {transform_indices = @transform_9, window_bounds = array<i64: 16, 8>}]} {
    %c0 = arith.constant 0 : index
    %c0_0 = arith.constant 0 : index
    %0 = vector.load %arg1[%c0, %c0_0] : memref<16x256xf32, #tpu.memory_space<vmem>>, vector<16x256xf32>
    %1 = arith.truncf %0 : vector<16x256xf32> to vector<16x256xbf16>
    %c0_1 = arith.constant 0 : index
    %c0_2 = arith.constant 0 : index
    %2 = vector.load %arg2[%c0_1, %c0_2] : memref<256x128xbf16, #tpu.memory_space<vmem>>, vector<256x128xbf16>
    %cst = arith.constant dense<0.000000e+00> : vector<16x128xf32>
    %3 = tpu.matmul %1, %2, %cst {dimension_numbers = #tpu.dot_dimension_numbers<[1], [0], [0], [1], [0, 0, 1, 1], [], []>} : vector<16x256xbf16>, vector<256x128xbf16>, vector<16x128xf32> -> vector<16x128xf32>
    %c0_3 = arith.constant 0 : index
    %c0_4 = arith.constant 0 : index
    %4 = vector.load %arg3[%c0_3, %c0_4] : memref<1x128xf32, #tpu.memory_space<vmem>>, vector<1x128xf32>
    %5 = vector.broadcast %4 : vector<1x128xf32> to vector<16x128xf32>
    %6 = arith.addf %3, %5 : vector<16x128xf32>
    %cst_5 = arith.constant 0.000000e+00 : f32
    %7 = vector.broadcast %cst_5 : f32 to vector<16x128xf32>
    %8 = arith.maximumf %6, %7 : vector<16x128xf32>
    %9 = arith.truncf %8 : vector<16x128xf32> to vector<16x128xbf16>
    %c0_6 = arith.constant 0 : index
    %c0_7 = arith.constant 0 : index
    %10 = vector.load %arg4[%c0_6, %c0_7] : memref<128x128xbf16, #tpu.memory_space<vmem>>, vector<128x128xbf16>
    %cst_8 = arith.constant dense<0.000000e+00> : vector<16x128xf32>
    %11 = tpu.matmul %9, %10, %cst_8 {dimension_numbers = #tpu.dot_dimension_numbers<[1], [0], [0], [1], [0, 0, 1, 1], [], []>} : vector<16x128xbf16>, vector<128x128xbf16>, vector<16x128xf32> -> vector<16x128xf32>
    %c0_9 = arith.constant 0 : index
    %c0_10 = arith.constant 0 : index
    %12 = vector.load %arg5[%c0_9, %c0_10] : memref<1x128xf32, #tpu.memory_space<vmem>>, vector<1x128xf32>
    %13 = vector.broadcast %12 : vector<1x128xf32> to vector<16x128xf32>
    %14 = arith.addf %11, %13 : vector<16x128xf32>
    %cst_11 = arith.constant 0.000000e+00 : f32
    %15 = vector.broadcast %cst_11 : f32 to vector<16x128xf32>
    %16 = arith.maximumf %14, %15 : vector<16x128xf32>
    %17 = arith.truncf %16 : vector<16x128xf32> to vector<16x128xbf16>
    %c0_12 = arith.constant 0 : index
    %c0_13 = arith.constant 0 : index
    %18 = vector.load %arg6[%c0_12, %c0_13] : memref<128x128xbf16, #tpu.memory_space<vmem>>, vector<128x128xbf16>
    %cst_14 = arith.constant dense<0.000000e+00> : vector<16x128xf32>
    %19 = tpu.matmul %17, %18, %cst_14 {dimension_numbers = #tpu.dot_dimension_numbers<[1], [0], [0], [1], [0, 0, 1, 1], [], []>} : vector<16x128xbf16>, vector<128x128xbf16>, vector<16x128xf32> -> vector<16x128xf32>
    %c0_15 = arith.constant 0 : index
    %c0_16 = arith.constant 0 : index
    %20 = vector.load %arg7[%c0_15, %c0_16] : memref<1x128xf32, #tpu.memory_space<vmem>>, vector<1x128xf32>
    %21 = vector.broadcast %20 : vector<1x128xf32> to vector<16x128xf32>
    %22 = arith.addf %19, %21 : vector<16x128xf32>
    %cst_17 = arith.constant 0.000000e+00 : f32
    %23 = vector.broadcast %cst_17 : f32 to vector<16x128xf32>
    %24 = arith.maximumf %22, %23 : vector<16x128xf32>
    %25 = arith.truncf %24 : vector<16x128xf32> to vector<16x128xbf16>
    %c0_18 = arith.constant 0 : index
    %c0_19 = arith.constant 0 : index
    %26 = vector.load %arg8[%c0_18, %c0_19] : memref<128x8xbf16, #tpu.memory_space<vmem>>, vector<128x8xbf16>
    %cst_20 = arith.constant dense<0.000000e+00> : vector<16x8xf32>
    %27 = tpu.matmul %25, %26, %cst_20 {dimension_numbers = #tpu.dot_dimension_numbers<[1], [0], [0], [1], [0, 0, 1, 1], [], []>} : vector<16x128xbf16>, vector<128x8xbf16>, vector<16x8xf32> -> vector<16x8xf32>
    %c0_21 = arith.constant 0 : index
    %c0_22 = arith.constant 0 : index
    %28 = vector.load %arg9[%c0_21, %c0_22] : memref<1x8xf32, #tpu.memory_space<vmem>>, vector<1x8xf32>
    %29 = vector.broadcast %28 : vector<1x8xf32> to vector<16x8xf32>
    %30 = arith.addf %27, %29 : vector<16x8xf32>
    %c0_23 = arith.constant 0 : index
    %c0_24 = arith.constant 0 : index
    %31 = vector.load %arg10[%c0_23, %c0_24] : memref<16x8xf32, #tpu.memory_space<vmem>>, vector<16x8xf32>
    tpu.vector_store %arg10[%c0_23, %c0_24], %30 {strides = array<i32>} : memref<16x8xf32, #tpu.memory_space<vmem>>, vector<16x8xf32>,
    return
  }
  func.func @transform_0(%arg0: i32) -> (i32, i32) {
    %c0_i32 = arith.constant 0 : i32
    %c0_i32_0 = arith.constant 0 : i32
    return %arg0, %c0_i32 : i32, i32
  }
  func.func @transform_1(%arg0: i32) -> (i32, i32) {
    %c0_i32 = arith.constant 0 : i32
    %c0_i32_0 = arith.constant 0 : i32
    %c0_i32_1 = arith.constant 0 : i32
    return %c0_i32, %c0_i32_0 : i32, i32
  }
  func.func @transform_2(%arg0: i32) -> (i32, i32) {
    %c0_i32 = arith.constant 0 : i32
    %c0_i32_0 = arith.constant 0 : i32
    %c0_i32_1 = arith.constant 0 : i32
    return %c0_i32, %c0_i32_0 : i32, i32
  }
  func.func @transform_3(%arg0: i32) -> (i32, i32) {
    %c0_i32 = arith.constant 0 : i32
    %c0_i32_0 = arith.constant 0 : i32
    %c0_i32_1 = arith.constant 0 : i32
    return %c0_i32, %c0_i32_0 : i32, i32
  }
  func.func @transform_4(%arg0: i32) -> (i32, i32) {
    %c0_i32 = arith.constant 0 : i32
    %c0_i32_0 = arith.constant 0 : i32
    %c0_i32_1 = arith.constant 0 : i32
    return %c0_i32, %c0_i32_0 : i32, i32
  }
  func.func @transform_5(%arg0: i32) -> (i32, i32) {
    %c0_i32 = arith.constant 0 : i32
    %c0_i32_0 = arith.constant 0 : i32
    %c0_i32_1 = arith.constant 0 : i32
    return %c0_i32, %c0_i32_0 : i32, i32
  }
  func.func @transform_6(%arg0: i32) -> (i32, i32) {
    %c0_i32 = arith.constant 0 : i32
    %c0_i32_0 = arith.constant 0 : i32
    %c0_i32_1 = arith.constant 0 : i32
    return %c0_i32, %c0_i32_0 : i32, i32
  }
  func.func @transform_7(%arg0: i32) -> (i32, i32) {
    %c0_i32 = arith.constant 0 : i32
    %c0_i32_0 = arith.constant 0 : i32
    %c0_i32_1 = arith.constant 0 : i32
    return %c0_i32, %c0_i32_0 : i32, i32
  }
  func.func @transform_8(%arg0: i32) -> (i32, i32) {
    %c0_i32 = arith.constant 0 : i32
    %c0_i32_0 = arith.constant 0 : i32
    %c0_i32_1 = arith.constant 0 : i32
    return %c0_i32, %c0_i32_0 : i32, i32
  }
  func.func @transform_9(%arg0: i32) -> (i32, i32) {
    %c0_i32 = arith.constant 0 : i32
    %c0_i32_0 = arith.constant 0 : i32
    return %arg0, %c0_i32 : i32, i32
  }
}

</mosaic_0001>

<llo_original>
// kernel: tpu_custom_call.1
$region0: #{tpu_custom_call.1}
  #allocation0 [shape = 'u32[]', space=smem, size = 0x4, offset = 0x4, fixed_abs, tag = 'smem constant byte address 0x4 - core index']
  #allocation1 [shape = 'u32[144,128]{1,0:T(1,128)}', space=vmem, size = 0x12000, scoped, tag = 'internal scratch']
  %s0 = inlined_call_operand.hbm [shape: f32[16,256], index: 0, kind: input, shape index: {}]
  %s1 = inlined_call_operand.hbm [shape: bf16[256,128], index: 1, kind: input, shape index: {}]
  %s2 = inlined_call_operand.vmem [shape: f32[1,128], index: 2, kind: input, shape index: {}]
  %s3 = inlined_call_operand.vmem [shape: bf16[128,128], index: 3, kind: input, shape index: {}]
  %s4 = inlined_call_operand.vmem [shape: f32[1,128], index: 4, kind: input, shape index: {}]
  %s5 = inlined_call_operand.hbm [shape: bf16[128,128], index: 5, kind: input, shape index: {}]
  %s6 = inlined_call_operand.vmem [shape: f32[1,128], index: 6, kind: input, shape index: {}]
  %s7 = inlined_call_operand.vmem [shape: bf16[128,8], index: 7, kind: input, shape index: {}]
  %s8 = inlined_call_operand.vmem [shape: f32[1,8], index: 8, kind: input, shape index: {}]
  %s9 = inlined_call_operand.vmem [shape: f32[16,8], index: 9, kind: output, shape index: {}]
  %s10 = sld [smem:[#allocation0]]
  $region58: #{tpu_custom_call.1} parent=0
    _
  %s12 = ssub.s32 1, %s10
  %s13 = scalar_select 0, %s12, %s10
  $region1: #{tpu_custom_call.1} parent=0
    #allocation2 [shape = 'u8[16384]{0}', space=vmem, size = 0x4000, scoped, tag = 'input window, operand 0, single buffered']
    #allocation3 [shape = 's32[1]{0}', space=sflag, size = 0x4, scoped, tag = 'scoped memory for tpu_custom_call.1']
    #allocation4 [shape = 'u8[65536]{0}', space=vmem, size = 0x10000, scoped, tag = 'input window, operand 1, single buffered']
    #allocation5 [shape = 's32[1]{0}', space=sflag, size = 0x4, scoped, tag = 'scoped memory for tpu_custom_call.1']
    #allocation6 [shape = 'u8[32768]{0}', space=vmem, size = 0x8000, scoped, tag = 'input window, operand 5, single buffered']
    %14 = vsyncpa [#allocation3], 0
    %15 = vsyncpa [#allocation5], 0
    // Predicated region
    $region2: #{tpu_custom_call.1} parent=1 // pred_check
      _
    $region3: #{tpu_custom_call.1} parent=1 // pred_check_branch
      %17 = sbr.rel (0) target = $region5
    $region4: #{tpu_custom_call.1} parent=1 // pred_region
      %s19 = ssub.s32 512, 512
      %20 = vsyncadd [#allocation3], %s19
      %s21 = sshll.u32 [#allocation2], 4
      %s22 = int_to_ptr.vmem [resolvable:$true] %s21
      %27 = dma.hbm_to_vmem [thread:$0]  %s0, 512, %s22, [#allocation3], 256, 256, 16
    $region5: #{tpu_custom_call.1} parent=1 // pred_fallthru
      _
    // Predicated region
    $region6: #{tpu_custom_call.1} parent=1 // pred_check
      _
    $region7: #{tpu_custom_call.1} parent=1 // pred_check_branch
      %29 = sbr.rel (0) target = $region9
    $region8: #{tpu_custom_call.1} parent=1 // pred_region
      %s31 = ssub.s32 2048, 2048
      %32 = vsyncadd [#allocation5], %s31
      %s33 = sshll.u32 [#allocation4], 4
      %s34 = int_to_ptr.vmem [resolvable:$true] %s33
      %39 = dma.hbm_to_vmem [thread:$0]  %s1, 2048, %s34, [#allocation5], 64, 64, 4
    $region9: #{tpu_custom_call.1} parent=1 // pred_fallthru
      _
    // Predicated region
    $region10: #{tpu_custom_call.1} parent=1 // pred_check
      _
    $region11: #{tpu_custom_call.1} parent=1 // pred_check_branch
      %41 = sbr.rel (0) target = $region13
    $region12: #{tpu_custom_call.1} parent=1 // pred_region
      _
    $region13: #{tpu_custom_call.1} parent=1 // pred_fallthru
      _
    // Predicated region
    $region14: #{tpu_custom_call.1} parent=1 // pred_check
      _
    $region15: #{tpu_custom_call.1} parent=1 // pred_check_branch
      %43 = sbr.rel (0) target = $region17
    $region16: #{tpu_custom_call.1} parent=1 // pred_region
      _
    $region17: #{tpu_custom_call.1} parent=1 // pred_fallthru
      _
    // Predicated region
    $region18: #{tpu_custom_call.1} parent=1 // pred_check
      _
    $region19: #{tpu_custom_call.1} parent=1 // pred_check_branch
      %45 = sbr.rel (0) target = $region21
    $region20: #{tpu_custom_call.1} parent=1 // pred_region
      _
    $region21: #{tpu_custom_call.1} parent=1 // pred_fallthru
      _
    // Predicated region
    $region22: #{tpu_custom_call.1} parent=1 // pred_check
      _
    $region23: #{tpu_custom_call.1} parent=1 // pred_check_branch
      %47 = sbr.rel (0) target = $region25
    $region24: #{tpu_custom_call.1} parent=1 // pred_region
      %s49 = ssub.s32 1024, 1024
      %50 = vsyncadd [#allocation5], %s49
      %s51 = sshll.u32 [#allocation6], 4
      %s52 = int_to_ptr.vmem [resolvable:$true] %s51
      %57 = dma.hbm_to_vmem [thread:$0]  %s5, 1024, %s52, [#allocation5], 64, 64, 4
    $region25: #{tpu_custom_call.1} parent=1 // pred_fallthru
      _
    // Predicated region
    $region26: #{tpu_custom_call.1} parent=1 // pred_check
      _
    $region27: #{tpu_custom_call.1} parent=1 // pred_check_branch
      %59 = sbr.rel (0) target = $region29
    $region28: #{tpu_custom_call.1} parent=1 // pred_region
      _
    $region29: #{tpu_custom_call.1} parent=1 // pred_fallthru
      _
    // Predicated region
    $region30: #{tpu_custom_call.1} parent=1 // pred_check
      _
    $region31: #{tpu_custom_call.1} parent=1 // pred_check_branch
      %61 = sbr.rel (0) target = $region33
    $region32: #{tpu_custom_call.1} parent=1 // pred_region
      _
    $region33: #{tpu_custom_call.1} parent=1 // pred_fallthru
      _
    // Predicated region
    $region34: #{tpu_custom_call.1} parent=1 // pred_check
      _
    $region35: #{tpu_custom_call.1} parent=1 // pred_check_branch
      %63 = sbr.rel (0) target = $region37
    $region36: #{tpu_custom_call.1} parent=1 // pred_region
      _
    $region37: #{tpu_custom_call.1} parent=1 // pred_fallthru
      _
    // Predicated region
    $region38: #{tpu_custom_call.1} parent=1 // pred_check
      _
    $region39: #{tpu_custom_call.1} parent=1 // pred_check_branch
      %65 = sbr.rel (0) target = $region41
    $region40: #{tpu_custom_call.1} parent=1 // pred_region
      %66 = dma.done [#allocation3], 512
    $region41: #{tpu_custom_call.1} parent=1 // pred_fallthru
      _
    // Predicated region
    $region42: #{tpu_custom_call.1} parent=1 // pred_check
      _
    $region43: #{tpu_custom_call.1} parent=1 // pred_check_branch
      %68 = sbr.rel (0) target = $region45
    $region44: #{tpu_custom_call.1} parent=1 // pred_region
      %69 = dma.done [#allocation5], 2048
    $region45: #{tpu_custom_call.1} parent=1 // pred_fallthru
      _
    // Predicated region
    $region46: #{tpu_custom_call.1} parent=1 // pred_check
      _
    $region47: #{tpu_custom_call.1} parent=1 // pred_check_branch
      %71 = sbr.rel (0) target = $region49
    $region48: #{tpu_custom_call.1} parent=1 // pred_region
      %72 = dma.done [#allocation5], 1024
    $region49: #{tpu_custom_call.1} parent=1 // pred_fallthru
      _
    %v74 = vld [vmem:[#allocation2] sm:$0xff]
    %v75 = vld [vmem:[#allocation2 + $0x8] sm:$0xff]
    %v76 = vld [vmem:[#allocation2 + $0x10] sm:$0xff]
    %v77 = vld [vmem:[#allocation2 + $0x18] sm:$0xff]
    %v78 = vpack.c.bf16 %v76, %v74
    %v79 = vpack.c.bf16 %v77, %v75
    %v80 = vld [vmem:[#allocation4] sm:$0xf]
    %v81 = vld [vmem:[#allocation4 + $0x4] sm:$0xf]
    %v82 = vld [vmem:[#allocation4 + $0x8] sm:$0xf]
    %v83 = vld [vmem:[#allocation4 + $0xc] sm:$0xf]
    %v84 = vld [vmem:[#allocation4 + $0x10] sm:$0xf]
    %v85 = vld [vmem:[#allocation4 + $0x14] sm:$0xf]
    %v86 = vld [vmem:[#allocation4 + $0x18] sm:$0xf]
    %v87 = vld [vmem:[#allocation4 + $0x1c] sm:$0xf]
    %v88 = vld [vmem:[#allocation4 + $0x20] sm:$0xf]
    %v89 = vld [vmem:[#allocation4 + $0x24] sm:$0xf]
    %v90 = vld [vmem:[#allocation4 + $0x28] sm:$0xf]
    %v91 = vld [vmem:[#allocation4 + $0x2c] sm:$0xf]
    %v92 = vld [vmem:[#allocation4 + $0x30] sm:$0xf]
    %v93 = vld [vmem:[#allocation4 + $0x34] sm:$0xf]
    %v94 = vld [vmem:[#allocation4 + $0x38] sm:$0xf]
    %v95 = vld [vmem:[#allocation4 + $0x3c] sm:$0xf]
    %v96 = vld [vmem:[#allocation4 + $0x40] sm:$0xf]
    %v97 = vld [vmem:[#allocation4 + $0x44] sm:$0xf]
    %v98 = vld [vmem:[#allocation4 + $0x48] sm:$0xf]
    %v99 = vld [vmem:[#allocation4 + $0x4c] sm:$0xf]
    %v100 = vld [vmem:[#allocation4 + $0x50] sm:$0xf]
    %v101 = vld [vmem:[#allocation4 + $0x54] sm:$0xf]
    %v102 = vld [vmem:[#allocation4 + $0x58] sm:$0xf]
    %v103 = vld [vmem:[#allocation4 + $0x5c] sm:$0xf]
    %v104 = vld [vmem:[#allocation4 + $0x60] sm:$0xf]
    %v105 = vld [vmem:[#allocation4 + $0x64] sm:$0xf]
    %v106 = vld [vmem:[#allocation4 + $0x68] sm:$0xf]
    %v107 = vld [vmem:[#allocation4 + $0x6c] sm:$0xf]
    %v108 = vld [vmem:[#allocation4 + $0x70] sm:$0xf]
    %v109 = vld [vmem:[#allocation4 + $0x74] sm:$0xf]
    %v110 = vld [vmem:[#allocation4 + $0x78] sm:$0xf]
    %v111 = vld [vmem:[#allocation4 + $0x7c] sm:$0xf]
    %v112 = vld [vmem:[%s2] sm:$0x1]
    %v114 = vlaneseq
    %v115 = vshrl.u32 %v114, 7
    %v116 = vsub.s32 0, %v115
    %v117 = vrot.slane %v112, %v116
    %v151 = vunpack.c.l.b16 %v80
    %v152 = vunpack.c.l.b16 %v81
    %v153 = vunpack.c.l.b16 %v82
    %v154 = vunpack.c.l.b16 %v83
    %v155 = vunpack.c.l.b16 %v84
    %v156 = vunpack.c.l.b16 %v85
    %v157 = vunpack.c.l.b16 %v86
    %v158 = vunpack.c.l.b16 %v87
    %v159 = vunpack.c.l.b16 %v88
    %v160 = vunpack.c.l.b16 %v89
    %v161 = vunpack.c.l.b16 %v90
    %v162 = vunpack.c.l.b16 %v91
    %v163 = vunpack.c.l.b16 %v92
    %v164 = vunpack.c.l.b16 %v93
    %v165 = vunpack.c.l.b16 %v94
    %v166 = vunpack.c.l.b16 %v95
    %v167 = vunpack.c.l.b16 %v96
    %v168 = vunpack.c.l.b16 %v97
    %v169 = vunpack.c.l.b16 %v98
    %v170 = vunpack.c.l.b16 %v99
    %v171 = vunpack.c.l.b16 %v100
    %v172 = vunpack.c.l.b16 %v101
    %v173 = vunpack.c.l.b16 %v102
    %v174 = vunpack.c.l.b16 %v103
    %v175 = vunpack.c.l.b16 %v104
    %v176 = vunpack.c.l.b16 %v105
    %v177 = vunpack.c.l.b16 %v106
    %v178 = vunpack.c.l.b16 %v107
    %v179 = vunpack.c.l.b16 %v108
    %v180 = vunpack.c.l.b16 %v109
    %v181 = vunpack.c.l.b16 %v110
    %v182 = vunpack.c.l.b16 %v111
    %v183 = vpack.c.b16 %v152, %v151
    %v184 = vpack.c.b16 %v154, %v153
    %v185 = vpack.c.b16 %v156, %v155
    %v186 = vpack.c.b16 %v158, %v157
    %v187 = vpack.c.b16 %v160, %v159
    %v188 = vpack.c.b16 %v162, %v161
    %v189 = vpack.c.b16 %v164, %v163
    %v190 = vpack.c.b16 %v166, %v165
    %v191 = vpack.c.b16 %v168, %v167
    %v192 = vpack.c.b16 %v170, %v169
    %v193 = vpack.c.b16 %v172, %v171
    %v194 = vpack.c.b16 %v174, %v173
    %v195 = vpack.c.b16 %v176, %v175
    %v196 = vpack.c.b16 %v178, %v177
    %v197 = vpack.c.b16 %v180, %v179
    %v198 = vpack.c.b16 %v182, %v181
    %215 = vmatprep.subr.bf16.mxu0 0
    %216 = vmatpush1.bf16.msra.mxu0 %v183
    %217 = vmatprep.subr.bf16.mxu0 0
    %218 = vmatpush1.bf16.msra.mxu0 %v184
    %219 = vmatprep.subr.bf16.mxu0 0
    %220 = vmatpush1.bf16.msra.mxu0 %v185
    %221 = vmatprep.subr.bf16.mxu0 0
    %222 = vmatpush1.bf16.msra.mxu0 %v186
    %223 = vmatprep.subr.bf16.mxu0 0
    %224 = vmatpush1.bf16.msra.mxu0 %v187
    %225 = vmatprep.subr.bf16.mxu0 0
    %226 = vmatpush1.bf16.msra.mxu0 %v188
    %227 = vmatprep.subr.bf16.mxu0 0
    %228 = vmatpush1.bf16.msra.mxu0 %v189
    %229 = vmatprep.subr.bf16.mxu0 0
    %230 = vmatpush1.bf16.msra.mxu0 %v190
    %231 = vmatprep.subr.bf16.mxu0 0
    %232 = vmatpush1.bf16.msra.mxu0 %v191
    %233 = vmatprep.subr.bf16.mxu0 0
    %234 = vmatpush1.bf16.msra.mxu0 %v192
    %235 = vmatprep.subr.bf16.mxu0 0
    %236 = vmatpush1.bf16.msra.mxu0 %v193
    %237 = vmatprep.subr.bf16.mxu0 0
    %238 = vmatpush1.bf16.msra.mxu0 %v194
    %239 = vmatprep.subr.bf16.mxu0 0
    %240 = vmatpush1.bf16.msra.mxu0 %v195
    %241 = vmatprep.subr.bf16.mxu0 0
    %242 = vmatpush1.bf16.msra.mxu0 %v196
    %243 = vmatprep.subr.bf16.mxu0 0
    %244 = vmatpush1.bf16.msra.mxu0 %v197
    %245 = vmatprep.subr.bf16.mxu0 0
    %246 = vmatpush1.bf16.msra.mxu0 %v198
    %247 = vmatprep.mubr.bf16.mxu0 %v79
    %248 = vmatmul.mubr.bf16.gmra.mrb[0].mxu0 %v78
    %v249 = vpop.f32.mrb[0].mxu0
    %v250 = vadd.f32 %v117, %v249
    %v251 = vpop.f32.mrb[0].mxu0
    %v252 = vpop.f32.mrb[0].mxu0
    %v253 = vadd.f32 %v117, %v252
    %v254 = vpop.f32.mrb[0].mxu0
    %255 = vdwg.mxu0
    %v256 = vmax.f32 %v250, 0.0
    %v257 = vmax.f32 %v253, 0.0
    %v258 = vpack.c.bf16 %v257, %v256
    %v259 = vld [vmem:[%s3] sm:$0xf]
    %v260 = vld [vmem:[%s3 + $0x4] sm:$0xf]
    %v261 = vld [vmem:[%s3 + $0x8] sm:$0xf]
    %v262 = vld [vmem:[%s3 + $0xc] sm:$0xf]
    %v263 = vld [vmem:[%s3 + $0x10] sm:$0xf]
    %v264 = vld [vmem:[%s3 + $0x14] sm:$0xf]
    %v265 = vld [vmem:[%s3 + $0x18] sm:$0xf]
    %v266 = vld [vmem:[%s3 + $0x1c] sm:$0xf]
    %v267 = vld [vmem:[%s3 + $0x20] sm:$0xf]
    %v268 = vld [vmem:[%s3 + $0x24] sm:$0xf]
    %v269 = vld [vmem:[%s3 + $0x28] sm:$0xf]
    %v270 = vld [vmem:[%s3 + $0x2c] sm:$0xf]
    %v271 = vld [vmem:[%s3 + $0x30] sm:$0xf]
    %v272 = vld [vmem:[%s3 + $0x34] sm:$0xf]
    %v273 = vld [vmem:[%s3 + $0x38] sm:$0xf]
    %v274 = vld [vmem:[%s3 + $0x3c] sm:$0xf]
    %v275 = vld [vmem:[%s4] sm:$0x1]
    %v277 = vlaneseq
    %v278 = vshrl.u32 %v277, 7
    %v279 = vsub.s32 0, %v278
    %v280 = vrot.slane %v275, %v279
    %v298 = vunpack.c.l.b16 %v259
    %v299 = vunpack.c.l.b16 %v260
    %v300 = vunpack.c.l.b16 %v261
    %v301 = vunpack.c.l.b16 %v262
    %v302 = vunpack.c.l.b16 %v263
    %v303 = vunpack.c.l.b16 %v264
    %v304 = vunpack.c.l.b16 %v265
    %v305 = vunpack.c.l.b16 %v266
    %v306 = vunpack.c.l.b16 %v267
    %v307 = vunpack.c.l.b16 %v268
    %v308 = vunpack.c.l.b16 %v269
    %v309 = vunpack.c.l.b16 %v270
    %v310 = vunpack.c.l.b16 %v271
    %v311 = vunpack.c.l.b16 %v272
    %v312 = vunpack.c.l.b16 %v273
    %v313 = vunpack.c.l.b16 %v274
    %v314 = vpack.c.b16 %v299, %v298
    %v315 = vpack.c.b16 %v301, %v300
    %v316 = vpack.c.b16 %v303, %v302
    %v317 = vpack.c.b16 %v305, %v304
    %v318 = vpack.c.b16 %v307, %v306
    %v319 = vpack.c.b16 %v309, %v308
    %v320 = vpack.c.b16 %v311, %v310
    %v321 = vpack.c.b16 %v313, %v312
    %330 = vmatprep.subr.bf16.mxu0 0
    %331 = vmatpush1.bf16.msra.mxu0 %v314
    %332 = vmatprep.subr.bf16.mxu0 0
    %333 = vmatpush1.bf16.msra.mxu0 %v315
    %334 = vmatprep.subr.bf16.mxu0 0
    %335 = vmatpush1.bf16.msra.mxu0 %v316
    %336 = vmatprep.subr.bf16.mxu0 0
    %337 = vmatpush1.bf16.msra.mxu0 %v317
    %338 = vmatprep.subr.bf16.mxu0 0
    %339 = vmatpush1.bf16.msra.mxu0 %v318
    %340 = vmatprep.subr.bf16.mxu0 0
    %341 = vmatpush1.bf16.msra.mxu0 %v319
    %342 = vmatprep.subr.bf16.mxu0 0
    %343 = vmatpush1.bf16.msra.mxu0 %v320
    %344 = vmatprep.subr.bf16.mxu0 0
    %345 = vmatpush1.bf16.msra.mxu0 %v321
    %346 = vmatprep.subr.bf16.mxu0 0
    %347 = vmatpush1.bf16.msra.mxu0 0
    %348 = vmatprep.subr.bf16.mxu0 0
    %349 = vmatpush1.bf16.msra.mxu0 0
    %350 = vmatprep.subr.bf16.mxu0 0
    %351 = vmatpush1.bf16.msra.mxu0 0
    %352 = vmatprep.subr.bf16.mxu0 0
    %353 = vmatpush1.bf16.msra.mxu0 0
    %354 = vmatprep.subr.bf16.mxu0 0
    %355 = vmatpush1.bf16.msra.mxu0 0
    %356 = vmatprep.subr.bf16.mxu0 0
    %357 = vmatpush1.bf16.msra.mxu0 0
    %358 = vmatprep.subr.bf16.mxu0 0
    %359 = vmatpush1.bf16.msra.mxu0 0
    %360 = vmatprep.subr.bf16.mxu0 0
    %361 = vmatpush1.bf16.msra.mxu0 0
    %362 = vmatprep.mubr.bf16.mxu0 0
    %363 = vmatmul.mubr.bf16.gmra.mrb[0].mxu0 %v258
    %v364 = vpop.f32.mrb[0].mxu0
    %v365 = vadd.f32 %v280, %v364
    %v366 = vpop.f32.mrb[0].mxu0
    %v367 = vpop.f32.mrb[0].mxu0
    %v368 = vadd.f32 %v280, %v367
    %v369 = vpop.f32.mrb[0].mxu0
    %370 = vdwg.mxu0
    %v371 = vmax.f32 %v365, 0.0
    %v372 = vmax.f32 %v368, 0.0
    %v373 = vpack.c.bf16 %v372, %v371
    %v374 = vld [vmem:[#allocation6] sm:$0xf]
    %v375 = vld [vmem:[#allocation6 + $0x4] sm:$0xf]
    %v376 = vld [vmem:[#allocation6 + $0x8] sm:$0xf]
    %v377 = vld [vmem:[#allocation6 + $0xc] sm:$0xf]
    %v378 = vld [vmem:[#allocation6 + $0x10] sm:$0xf]
    %v379 = vld [vmem:[#allocation6 + $0x14] sm:$0xf]
    %v380 = vld [vmem:[#allocation6 + $0x18] sm:$0xf]
    %v381 = vld [vmem:[#allocation6 + $0x1c] sm:$0xf]
    %v382 = vld [vmem:[#allocation6 + $0x20] sm:$0xf]
    %v383 = vld [vmem:[#allocation6 + $0x24] sm:$0xf]
    %v384 = vld [vmem:[#allocation6 + $0x28] sm:$0xf]
    %v385 = vld [vmem:[#allocation6 + $0x2c] sm:$0xf]
    %v386 = vld [vmem:[#allocation6 + $0x30] sm:$0xf]
    %v387 = vld [vmem:[#allocation6 + $0x34] sm:$0xf]
    %v388 = vld [vmem:[#allocation6 + $0x38] sm:$0xf]
    %v389 = vld [vmem:[#allocation6 + $0x3c] sm:$0xf]
    %v390 = vld [vmem:[%s6] sm:$0x1]
    %v392 = vlaneseq
    %v393 = vshrl.u32 %v392, 7
    %v394 = vsub.s32 0, %v393
    %v395 = vrot.slane %v390, %v394
    %v413 = vunpack.c.l.b16 %v374
    %v414 = vunpack.c.l.b16 %v375
    %v415 = vunpack.c.l.b16 %v376
    %v416 = vunpack.c.l.b16 %v377
    %v417 = vunpack.c.l.b16 %v378
    %v418 = vunpack.c.l.b16 %v379
    %v419 = vunpack.c.l.b16 %v380
    %v420 = vunpack.c.l.b16 %v381
    %v421 = vunpack.c.l.b16 %v382
    %v422 = vunpack.c.l.b16 %v383
    %v423 = vunpack.c.l.b16 %v384
    %v424 = vunpack.c.l.b16 %v385
    %v425 = vunpack.c.l.b16 %v386
    %v426 = vunpack.c.l.b16 %v387
    %v427 = vunpack.c.l.b16 %v388
    %v428 = vunpack.c.l.b16 %v389
    %v429 = vpack.c.b16 %v414, %v413
    %v430 = vpack.c.b16 %v416, %v415
    %v431 = vpack.c.b16 %v418, %v417
    %v432 = vpack.c.b16 %v420, %v419
    %v433 = vpack.c.b16 %v422, %v421
    %v434 = vpack.c.b16 %v424, %v423
    %v435 = vpack.c.b16 %v426, %v425
    %v436 = vpack.c.b16 %v428, %v427
    %445 = vmatprep.subr.bf16.mxu0 0
    %446 = vmatpush1.bf16.msra.mxu0 %v429
    %447 = vmatprep.subr.bf16.mxu0 0
    %448 = vmatpush1.bf16.msra.mxu0 %v430
    %449 = vmatprep.subr.bf16.mxu0 0
    %450 = vmatpush1.bf16.msra.mxu0 %v431
    %451 = vmatprep.subr.bf16.mxu0 0
    %452 = vmatpush1.bf16.msra.mxu0 %v432
    %453 = vmatprep.subr.bf16.mxu0 0
    %454 = vmatpush1.bf16.msra.mxu0 %v433
    %455 = vmatprep.subr.bf16.mxu0 0
    %456 = vmatpush1.bf16.msra.mxu0 %v434
    %457 = vmatprep.subr.bf16.mxu0 0
    %458 = vmatpush1.bf16.msra.mxu0 %v435
    %459 = vmatprep.subr.bf16.mxu0 0
    %460 = vmatpush1.bf16.msra.mxu0 %v436
    %461 = vmatprep.subr.bf16.mxu0 0
    %462 = vmatpush1.bf16.msra.mxu0 0
    %463 = vmatprep.subr.bf16.mxu0 0
    %464 = vmatpush1.bf16.msra.mxu0 0
    %465 = vmatprep.subr.bf16.mxu0 0
    %466 = vmatpush1.bf16.msra.mxu0 0
    %467 = vmatprep.subr.bf16.mxu0 0
    %468 = vmatpush1.bf16.msra.mxu0 0
    %469 = vmatprep.subr.bf16.mxu0 0
    %470 = vmatpush1.bf16.msra.mxu0 0
    %471 = vmatprep.subr.bf16.mxu0 0
    %472 = vmatpush1.bf16.msra.mxu0 0
    %473 = vmatprep.subr.bf16.mxu0 0
    %474 = vmatpush1.bf16.msra.mxu0 0
    %475 = vmatprep.subr.bf16.mxu0 0
    %476 = vmatpush1.bf16.msra.mxu0 0
    %477 = vmatprep.mubr.bf16.mxu0 0
    %478 = vmatmul.mubr.bf16.gmra.mrb[0].mxu0 %v373
    %v479 = vpop.f32.mrb[0].mxu0
    %v480 = vadd.f32 %v395, %v479
    %v481 = vpop.f32.mrb[0].mxu0
    %v482 = vpop.f32.mrb[0].mxu0
    %v483 = vadd.f32 %v395, %v482
    %v484 = vpop.f32.mrb[0].mxu0
    %485 = vdwg.mxu0
    %v486 = vmax.f32 %v480, 0.0
    %v487 = vmax.f32 %v483, 0.0
    %v488 = vpack.c.bf16 %v487, %v486
    %v489 = vld [vmem:[%s7] sm:$0xf]
    %v490 = vld [vmem:[%s7 + $0x4] sm:$0xf]
    %v491 = vld [vmem:[%s7 + $0x8] sm:$0xf]
    %v492 = vld [vmem:[%s7 + $0xc] sm:$0xf]
    %v493 = vld [vmem:[%s7 + $0x10] sm:$0xf]
    %v494 = vld [vmem:[%s7 + $0x14] sm:$0xf]
    %v495 = vld [vmem:[%s7 + $0x18] sm:$0xf]
    %v496 = vld [vmem:[%s7 + $0x1c] sm:$0xf]
    %v497 = vld [vmem:[%s7 + $0x20] sm:$0xf]
    %v498 = vld [vmem:[%s7 + $0x24] sm:$0xf]
    %v499 = vld [vmem:[%s7 + $0x28] sm:$0xf]
    %v500 = vld [vmem:[%s7 + $0x2c] sm:$0xf]
    %v501 = vld [vmem:[%s7 + $0x30] sm:$0xf]
    %v502 = vld [vmem:[%s7 + $0x34] sm:$0xf]
    %v503 = vld [vmem:[%s7 + $0x38] sm:$0xf]
    %v504 = vld [vmem:[%s7 + $0x3c] sm:$0xf]
    %v505 = vld [vmem:[%s8] sm:$0x1]
    %v507 = vlaneseq
    %v508 = vshrl.u32 %v507, 7
    %v509 = vsub.s32 0, %v508
    %v510 = vrot.slane %v505, %v509
    %v528 = vunpack.c.l.b16 %v489
    %v529 = vunpack.c.l.b16 %v490
    %v530 = vunpack.c.l.b16 %v491
    %v531 = vunpack.c.l.b16 %v492
    %v532 = vunpack.c.l.b16 %v493
    %v533 = vunpack.c.l.b16 %v494
    %v534 = vunpack.c.l.b16 %v495
    %v535 = vunpack.c.l.b16 %v496
    %v536 = vunpack.c.l.b16 %v497
    %v537 = vunpack.c.l.b16 %v498
    %v538 = vunpack.c.l.b16 %v499
    %v539 = vunpack.c.l.b16 %v500
    %v540 = vunpack.c.l.b16 %v501
    %v541 = vunpack.c.l.b16 %v502
    %v542 = vunpack.c.l.b16 %v503
    %v543 = vunpack.c.l.b16 %v504
    %v544 = vpack.c.b16 %v529, %v528
    %v545 = vpack.c.b16 %v531, %v530
    %v546 = vpack.c.b16 %v533, %v532
    %v547 = vpack.c.b16 %v535, %v534
    %v548 = vpack.c.b16 %v537, %v536
    %v549 = vpack.c.b16 %v539, %v538
    %v550 = vpack.c.b16 %v541, %v540
    %v551 = vpack.c.b16 %v543, %v542
    %560 = vmatprep.subr.bf16.mxu0 0
    %561 = vmatpush1.bf16.msra.mxu0 %v544
    %562 = vmatprep.subr.bf16.mxu0 0
    %563 = vmatpush1.bf16.msra.mxu0 %v545
    %564 = vmatprep.subr.bf16.mxu0 0
    %565 = vmatpush1.bf16.msra.mxu0 %v546
    %566 = vmatprep.subr.bf16.mxu0 0
    %567 = vmatpush1.bf16.msra.mxu0 %v547
    %568 = vmatprep.subr.bf16.mxu0 0
    %569 = vmatpush1.bf16.msra.mxu0 %v548
    %570 = vmatprep.subr.bf16.mxu0 0
    %571 = vmatpush1.bf16.msra.mxu0 %v549
    %572 = vmatprep.subr.bf16.mxu0 0
    %573 = vmatpush1.bf16.msra.mxu0 %v550
    %574 = vmatprep.subr.bf16.mxu0 0
    %575 = vmatpush1.bf16.msra.mxu0 %v551
    %576 = vmatprep.subr.bf16.mxu0 0
    %577 = vmatpush1.bf16.msra.mxu0 0
    %578 = vmatprep.subr.bf16.mxu0 0
    %579 = vmatpush1.bf16.msra.mxu0 0
    %580 = vmatprep.subr.bf16.mxu0 0
    %581 = vmatpush1.bf16.msra.mxu0 0
    %582 = vmatprep.subr.bf16.mxu0 0
    %583 = vmatpush1.bf16.msra.mxu0 0
    %584 = vmatprep.subr.bf16.mxu0 0
    %585 = vmatpush1.bf16.msra.mxu0 0
    %586 = vmatprep.subr.bf16.mxu0 0
    %587 = vmatpush1.bf16.msra.mxu0 0
    %588 = vmatprep.subr.bf16.mxu0 0
    %589 = vmatpush1.bf16.msra.mxu0 0
    %590 = vmatprep.subr.bf16.mxu0 0
    %591 = vmatpush1.bf16.msra.mxu0 0
    %592 = vmatprep.mubr.bf16.mxu0 0
    %593 = vmatmul.mubr.bf16.gmra.mrb[0].mxu0 %v488
    %v594 = vpop.f32.mrb[0].mxu0
    %v595 = vadd.f32 %v510, %v594
    %v596 = vpop.f32.mrb[0].mxu0
    %v597 = vpop.f32.mrb[0].mxu0
    %v598 = vadd.f32 %v510, %v597
    %v599 = vpop.f32.mrb[0].mxu0
    %600 = vdwg.mxu0
    %vm601 = vcmask 64512
    %602 = vst.msk [vmem:[%s9] sm:$0xff] %vm601, %v595
    %603 = vst.msk [vmem:[%s9 + $0x8] sm:$0xff] %vm601, %v598
    // Predicated region
    $region50: #{tpu_custom_call.1} parent=1 // pred_check
      _
    $region51: #{tpu_custom_call.1} parent=1 // pred_check_branch
      %605 = sbr.rel (0) target = $region53
    $region52: #{tpu_custom_call.1} parent=1 // pred_region
      _
    $region53: #{tpu_custom_call.1} parent=1 // pred_fallthru
      _
    // Predicated region
    $region54: #{tpu_custom_call.1} parent=1 // pred_check
      _
    $region55: #{tpu_custom_call.1} parent=1 // pred_check_branch
      %607 = sbr.rel (0) target = $region57
    $region56: #{tpu_custom_call.1} parent=1 // pred_region
      _
    $region57: #{tpu_custom_call.1} parent=1 // pred_fallthru
      _
    %608 = vsyncpa [#allocation3], 1
    %609 = vsyncpa [#allocation5], 1

</llo_original>
